<compile_context>
chip_gen: v5e
topology: v5e:2x2
jax: 0.10.0
libtpu: 0.0.40
codegen_flags: <defaults>
</compile_context>

<pallas_src>
import numpy as np
import jax
import jax.numpy as jnp
from jax.experimental import pallas as pl
from jax.experimental.pallas import tpu as pltpu


BIT = 4
PACK = 32 // BIT  # 8 nibbles per int32


def _quantlinear_kernel(xt_ref, qw_ref, sc_ref, be_ref, y_ref, acc_ref):
    # xt_ref : (PACK, K8b) compute dtype   xt[s, r] = x[PACK*r + s]  (current K-block slice)
    # qw_ref : (K8b, Nt)  int32            packed 4-bit weights
    # sc_ref : (1, Nt) f32                 scales
    # be_ref : (1, Nt) f32                 bias - zeros * sum(x)   (precomputed in wrapper)
    # y_ref  : (1, Nt) f32
    # acc_ref: (1, Nt) f32 scratch         accumulates (x @ q) over K blocks
    k = pl.program_id(1)

    @pl.when(k == 0)
    def _init():
        acc_ref[...] = jnp.zeros_like(acc_ref)

    xt = xt_ref[...]                                   # (PACK, K8b)
    qwu = pltpu.bitcast(qw_ref[...], jnp.uint32)       # free reinterpret -> logical shifts

    partials = []
    for s in range(PACK):                              # static unroll: shifts are immediates
        if s == 0:
            nib = qwu & 0xF                            # no shift needed
        elif s == PACK - 1:
            nib = qwu >> (BIT * s)                     # logical shift: top nibble, no mask
        else:
            nib = (qwu >> (BIT * s)) & 0xF
        # Plane keeps qweight's packed layout -> no relayout on the K*Nt tensor.
        plane = pltpu.bitcast(nib, jnp.int32).astype(xt.dtype)     # (K8b, Nt)
        partials.append(jnp.dot(xt[s:s + 1, :], plane,
                                preferred_element_type=jnp.float32))  # (1, Nt) f32
    # Pairwise tree-sum: the 8 dots stay independent (no serial acc chain), one acc update.
    while len(partials) > 1:
        partials = [partials[i] + partials[i + 1] for i in range(0, len(partials), 2)]
    acc_ref[...] += partials[0]

    @pl.when(k == pl.num_programs(1) - 1)
    def _finalize():
        y_ref[...] = (sc_ref[...] * acc_ref[...] + be_ref[...]).astype(y_ref.dtype)


def _device_kind():
    try:
        return jax.devices()[0].device_kind.lower()
    except Exception:
        return ""


def _pick_n_tile(n, num_tc):
    divs = [c for c in (1024, 512, 256, 128) if n % c == 0]
    if not divs:
        return None  # caller pads N to a multiple of 128
    if num_tc > 1:
        for c in divs:                       # widest tile giving an even (per-TC) tile count
            if (n // c) % num_tc == 0:
                return c
    return divs[0]                           # single TC: just take the widest lane-dense tile


# K8 tiles restricted to multiples of 128 so the xt block's last dim is always a legal lane dim.
_K8_TILES = (4096, 2048, 1024, 512, 256, 128)


def _pick_k8_tile(k8, n_tile, budget_elems):
    if k8 * n_tile <= budget_elems:
        return k8                            # full K8 block (always legal: equals array dim)
    for c in _K8_TILES:
        if k8 % c == 0 and c * n_tile <= budget_elems:
            return c
    return None                              # caller pads K8 to a multiple of a fitting tile


def quant_linear_forward(x, qweight, scales, zeros, bias, *,
                         n_tile=None, k8_tile=None, compute_dtype=None):
    """Pallas forward for QuantLinear (bit=4). x must be a single token."""
    if x.shape[-1] != x.size:
        raise ValueError("Only supports a single token currently.")
    out_shape = list(x.shape)
    K = x.shape[-1]
    K8, N = qweight.shape
    assert K == K8 * PACK, "infeatures must be a multiple of 8 for the 4-bit packing"
    out_shape[-1] = N

    kind = _device_kind()
    is_v7 = "v7" in kind
    is_v6 = "v6" in kind
    num_tc = 2 if (is_v7 or "v4" in kind or "v5p" in kind) else 1
    if compute_dtype is None:
        # bf16 planes/x are exact for nibbles 0..15 and cut MXU/VMEM cost on v6e/v7x; keep
        # f32 on v5e / unknown chips (pass compute_dtype=jnp.float32 for exact f32 inputs).
        compute_dtype = jnp.bfloat16 if (is_v6 or is_v7) else jnp.float32
    budget_elems = (1 << 20) if is_v6 else (512 * 1024)

    in_dtype = x.dtype
    xf = x.reshape(-1).astype(jnp.float32)
    # xt[s, r] = x[8*r + s]; tiny K-element relayout done once outside the kernel.
    xt = xf.reshape(K8, PACK).T                                   # (PACK, K8) f32
    sc2 = scales.reshape(1, N).astype(jnp.float32)
    zp2 = zeros.reshape(1, N).astype(jnp.float32)
    if bias is None:
        b2 = jnp.zeros((1, N), jnp.float32)
    else:
        b2 = bias.reshape(1, N).astype(jnp.float32)
    # Hoisted correction: y = scales * (x @ q) + (bias - zeros * sum(x)).
    b_eff = b2 - zp2 * jnp.sum(xf)
    xt = xt.astype(compute_dtype)

    # ---- tile selection (with zero-padding for awkward shapes) ----
    Np = N
    if n_tile is None:
        n_tile = _pick_n_tile(N, num_tc)
        if n_tile is None:                                  # tiny / odd N: pad to 128 lanes
            Np = ((N + 127) // 128) * 128
            n_tile = _pick_n_tile(Np, num_tc)
    assert Np % n_tile == 0

    K8p = K8
    if k8_tile is None:
        k8_tile = _pick_k8_tile(K8, n_tile, budget_elems)
        if k8_tile is None:                                 # no divisor fits: pad K8
            c = max(c for c in _K8_TILES if c * n_tile <= budget_elems)
            K8p = ((K8 + c - 1) // c) * c
            k8_tile = c
    assert K8p % k8_tile == 0

    if Np != N:
        qweight = jnp.pad(qweight, ((0, 0), (0, Np - N)))
        sc2 = jnp.pad(sc2, ((0, 0), (0, Np - N)))
        b_eff = jnp.pad(b_eff, ((0, 0), (0, Np - N)))
    if K8p != K8:
        qweight = jnp.pad(qweight, ((0, K8p - K8), (0, 0)))   # zero rows -> zero planes
        xt = jnp.pad(xt, ((0, 0), (0, K8p - K8)))

    grid = (Np // n_tile, K8p // k8_tile)   # N parallel, K reduction last ("arbitrary")

    # Explicit VMEM budget: double-buffered packed int32 tile + up to ~4 live unpacked-plane
    # temporaries from the 8-way unrolled loop + xt double buffer + small per-N-tile vectors.
    plane_bytes = jnp.dtype(compute_dtype).itemsize
    est = (2 * 4 * k8_tile * n_tile
           + 4 * plane_bytes * k8_tile * n_tile
           + 2 * PACK * k8_tile * plane_bytes
           + 16 * n_tile * 4)
    vmem_limit = int(min(max(est + (8 << 20), 32 << 20), 64 << 20))

    y = pl.pallas_call(
        _quantlinear_kernel,
        out_shape=jax.ShapeDtypeStruct((1, Np), jnp.float32),
        grid_spec=pltpu.PrefetchScalarGridSpec(
            num_scalar_prefetch=0,
            grid=grid,
            in_specs=[
                pl.BlockSpec((PACK, k8_tile), lambda j, k: (0, k)),    # xt
                pl.BlockSpec((k8_tile, n_tile), lambda j, k: (k, j)),  # packed weights
                pl.BlockSpec((1, n_tile), lambda j, k: (0, j)),        # scales
                pl.BlockSpec((1, n_tile), lambda j, k: (0, j)),        # bias - zeros*sum(x)
            ],
            out_specs=pl.BlockSpec((1, n_tile), lambda j, k: (0, j)),
            scratch_shapes=[
                pltpu.VMEM((1, n_tile), jnp.float32),   # x @ q accumulator
            ],
        ),
        compiler_params=pltpu.CompilerParams(
            dimension_semantics=("parallel", "arbitrary"),
            vmem_limit_bytes=vmem_limit,
        ),
        cost_estimate=pl.CostEstimate(
            flops=2 * K * N,
            transcendentals=0,
            bytes_accessed=K8p * Np * 4 + 3 * Np * 4 + PACK * K8p * plane_bytes,
        ),
    )(xt, qweight, sc2, b_eff)

    if Np != N:
        y = y[:, :N]
    return y.astype(in_dtype).reshape(out_shape)


def pack_int4(intweight_np):
    """Pack (K, N) values in [0, 15] into (K//8, N) int32 (QuantLinear.pack, bit=4)."""
    K, N = intweight_np.shape
    assert K % PACK == 0
    q = intweight_np.astype(np.uint32)
    qw = np.zeros((K // PACK, N), dtype=np.uint32)
    for s in range(PACK):
        qw |= q[s::PACK, :] << (BIT * s)
    return jnp.asarray(qw.view(np.int32))


if __name__ == "__main__":
    key = jax.random.PRNGKey(0)
    k_x, k_q, k_s, k_z, k_b = jax.random.split(key, 5)

    infeatures, outfeatures = 256, 512

    # Deterministic synthetic "packed" parameters (as if QuantLinear.pack had been called).
    intweight = jax.random.randint(k_q, (infeatures, outfeatures), 0, 16, dtype=jnp.int32)
    qweight = pack_int4(np.asarray(intweight).astype(np.uint32))        # (K//8, N) int32
    scales = jax.random.uniform(k_s, (outfeatures, 1), jnp.float32, 0.01, 0.1)
    zero_point = jax.random.randint(k_z, (outfeatures, 1), 0, 16).astype(jnp.float32)
    zeros = zero_point * scales                                         # stored as in pack()
    bias = jax.random.normal(k_b, (outfeatures,), jnp.float32)

    # Single-token input (x.shape[-1] == x.numel()). Values are quantized to multiples of
    # 1/4 so they are exactly representable in bf16 as well as f32; the check is then
    # insensitive to the compute dtype choice and can be asserted tightly vs f64.
    x = jnp.round(jax.random.normal(k_x, (1, infeatures), jnp.float32) * 4.0) / 4.0

    y = quant_linear_forward(x, qweight, scales, zeros, bias)
    y = jax.block_until_ready(y)

    # Independent float64 host reference: dequantize then matmul.
    iw = np.asarray(intweight, dtype=np.float64)
    sc_np = np.asarray(scales, dtype=np.float64)
    zp_np = np.asarray(zeros, dtype=np.float64)
    w_deq = iw * sc_np.T - zp_np.T                                      # (K, N)
    y_ref = np.asarray(x, dtype=np.float64) @ w_deq + np.asarray(bias, dtype=np.float64)[None, :]
    np.testing.assert_allclose(np.asarray(y, dtype=np.float64), y_ref, rtol=1e-4, atol=1e-4)

    assert y.shape == (1, outfeatures)
    print("KERNEL_OK")
</pallas_src>

<mosaic_0001>
module attributes {stable_mosaic.version = 11 : i64} {
  func.func @_quantlinear_kernel(%arg0: i32, %arg1: i32, %arg2: memref<8x32xf32, #tpu.memory_space<vmem>>, %arg3: memref<32x512xi32, #tpu.memory_space<vmem>>, %arg4: memref<1x512xf32, #tpu.memory_space<vmem>>, %arg5: memref<1x512xf32, #tpu.memory_space<vmem>>, %arg6: memref<1x512xf32, #tpu.memory_space<vmem>>, %arg7: memref<1x512xf32, #tpu.memory_space<vmem>>) attributes {dimension_semantics = [#tpu.dimension_semantics<parallel>, #tpu.dimension_semantics<arbitrary>], iteration_bounds = array<i64: 1, 1>, scalar_prefetch = 0 : i64, scratch_operands = 1 : i64, tpu.core_type = #tpu.core_type<tc>, window_params = [{transform_indices = @transform_0, window_bounds = array<i64: 8, 32>}, {transform_indices = @transform_1, window_bounds = array<i64: 32, 512>}, {transform_indices = @transform_2, window_bounds = array<i64: 1, 512>}, {transform_indices = @transform_3, window_bounds = array<i64: 1, 512>}, {transform_indices = @transform_4, window_bounds = array<i64: 1, 512>}]} {
    %c0_i32 = arith.constant 0 : i32
    %0 = arith.cmpi eq, %arg1, %c0_i32 : i32
    %1 = arith.extui %0 : i1 to i32
    %c0_i32_0 = arith.constant 0 : i32
    %2 = arith.cmpi ne, %1, %c0_i32_0 : i32
    scf.if %2 {
      %cst_23 = arith.constant 0.000000e+00 : f32
      %79 = vector.broadcast %cst_23 : f32 to vector<1x512xf32>
      %c0_24 = arith.constant 0 : index
      %c0_25 = arith.constant 0 : index
      %80 = vector.load %arg7[%c0_24, %c0_25] : memref<1x512xf32, #tpu.memory_space<vmem>>, vector<1x512xf32>
      tpu.vector_store %arg7[%c0_24, %c0_25], %79 {strides = array<i32>} : memref<1x512xf32, #tpu.memory_space<vmem>>, vector<1x512xf32>,
    } else {
    }
    %c0 = arith.constant 0 : index
    %c0_1 = arith.constant 0 : index
    %3 = vector.load %arg2[%c0, %c0_1] : memref<8x32xf32, #tpu.memory_space<vmem>>, vector<8x32xf32>
    %c0_2 = arith.constant 0 : index
    %c0_3 = arith.constant 0 : index
    %4 = vector.load %arg3[%c0_2, %c0_3] : memref<32x512xi32, #tpu.memory_space<vmem>>, vector<32x512xi32>
    %5 = tpu.bitcast %4 : vector<32x512xi32> -> vector<32x512xi32>
    %c15_i32 = arith.constant 15 : i32
    %6 = vector.broadcast %c15_i32 : i32 to vector<32x512xi32>
    %7 = arith.andi %5, %6 : vector<32x512xi32>
    %8 = tpu.bitcast %7 : vector<32x512xi32> -> vector<32x512xi32>
    %9 = arith.sitofp %8 : vector<32x512xi32> to vector<32x512xf32>
    %10 = vector.extract_strided_slice %3 {offsets = [0, 0], sizes = [1, 32], strides = [1, 1]} : vector<8x32xf32> to vector<1x32xf32>
    %cst = arith.constant dense<0.000000e+00> : vector<1x512xf32>
    %11 = tpu.matmul %10, %9, %cst {dimension_numbers = #tpu.dot_dimension_numbers<[1], [0], [0], [1], [0, 0, 1, 1], [], []>} : vector<1x32xf32>, vector<32x512xf32>, vector<1x512xf32> -> vector<1x512xf32>
    %c4_i32 = arith.constant 4 : i32
    %12 = vector.broadcast %c4_i32 : i32 to vector<32x512xi32>
    %13 = arith.shrui %5, %12 : vector<32x512xi32>
    %c15_i32_4 = arith.constant 15 : i32
    %14 = vector.broadcast %c15_i32_4 : i32 to vector<32x512xi32>
    %15 = arith.andi %13, %14 : vector<32x512xi32>
    %16 = tpu.bitcast %15 : vector<32x512xi32> -> vector<32x512xi32>
    %17 = arith.sitofp %16 : vector<32x512xi32> to vector<32x512xf32>
    %18 = vector.extract_strided_slice %3 {offsets = [1, 0], sizes = [1, 32], strides = [1, 1]} : vector<8x32xf32> to vector<1x32xf32>
    %cst_5 = arith.constant dense<0.000000e+00> : vector<1x512xf32>
    %19 = tpu.matmul %18, %17, %cst_5 {dimension_numbers = #tpu.dot_dimension_numbers<[1], [0], [0], [1], [0, 0, 1, 1], [], []>} : vector<1x32xf32>, vector<32x512xf32>, vector<1x512xf32> -> vector<1x512xf32>
    %c8_i32 = arith.constant 8 : i32
    %20 = vector.broadcast %c8_i32 : i32 to vector<32x512xi32>
    %21 = arith.shrui %5, %20 : vector<32x512xi32>
    %c15_i32_6 = arith.constant 15 : i32
    %22 = vector.broadcast %c15_i32_6 : i32 to vector<32x512xi32>
    %23 = arith.andi %21, %22 : vector<32x512xi32>
    %24 = tpu.bitcast %23 : vector<32x512xi32> -> vector<32x512xi32>
    %25 = arith.sitofp %24 : vector<32x512xi32> to vector<32x512xf32>
    %26 = vector.extract_strided_slice %3 {offsets = [2, 0], sizes = [1, 32], strides = [1, 1]} : vector<8x32xf32> to vector<1x32xf32>
    %cst_7 = arith.constant dense<0.000000e+00> : vector<1x512xf32>
    %27 = tpu.matmul %26, %25, %cst_7 {dimension_numbers = #tpu.dot_dimension_numbers<[1], [0], [0], [1], [0, 0, 1, 1], [], []>} : vector<1x32xf32>, vector<32x512xf32>, vector<1x512xf32> -> vector<1x512xf32>
    %c12_i32 = arith.constant 12 : i32
    %28 = vector.broadcast %c12_i32 : i32 to vector<32x512xi32>
    %29 = arith.shrui %5, %28 : vector<32x512xi32>
    %c15_i32_8 = arith.constant 15 : i32
    %30 = vector.broadcast %c15_i32_8 : i32 to vector<32x512xi32>
    %31 = arith.andi %29, %30 : vector<32x512xi32>
    %32 = tpu.bitcast %31 : vector<32x512xi32> -> vector<32x512xi32>
    %33 = arith.sitofp %32 : vector<32x512xi32> to vector<32x512xf32>
    %34 = vector.extract_strided_slice %3 {offsets = [3, 0], sizes = [1, 32], strides = [1, 1]} : vector<8x32xf32> to vector<1x32xf32>
    %cst_9 = arith.constant dense<0.000000e+00> : vector<1x512xf32>
    %35 = tpu.matmul %34, %33, %cst_9 {dimension_numbers = #tpu.dot_dimension_numbers<[1], [0], [0], [1], [0, 0, 1, 1], [], []>} : vector<1x32xf32>, vector<32x512xf32>, vector<1x512xf32> -> vector<1x512xf32>
    %c16_i32 = arith.constant 16 : i32
    %36 = vector.broadcast %c16_i32 : i32 to vector<32x512xi32>
    %37 = arith.shrui %5, %36 : vector<32x512xi32>
    %c15_i32_10 = arith.constant 15 : i32
    %38 = vector.broadcast %c15_i32_10 : i32 to vector<32x512xi32>
    %39 = arith.andi %37, %38 : vector<32x512xi32>
    %40 = tpu.bitcast %39 : vector<32x512xi32> -> vector<32x512xi32>
    %41 = arith.sitofp %40 : vector<32x512xi32> to vector<32x512xf32>
    %42 = vector.extract_strided_slice %3 {offsets = [4, 0], sizes = [1, 32], strides = [1, 1]} : vector<8x32xf32> to vector<1x32xf32>
    %cst_11 = arith.constant dense<0.000000e+00> : vector<1x512xf32>
    %43 = tpu.matmul %42, %41, %cst_11 {dimension_numbers = #tpu.dot_dimension_numbers<[1], [0], [0], [1], [0, 0, 1, 1], [], []>} : vector<1x32xf32>, vector<32x512xf32>, vector<1x512xf32> -> vector<1x512xf32>
    %c20_i32 = arith.constant 20 : i32
    %44 = vector.broadcast %c20_i32 : i32 to vector<32x512xi32>
    %45 = arith.shrui %5, %44 : vector<32x512xi32>
    %c15_i32_12 = arith.constant 15 : i32
    %46 = vector.broadcast %c15_i32_12 : i32 to vector<32x512xi32>
    %47 = arith.andi %45, %46 : vector<32x512xi32>
    %48 = tpu.bitcast %47 : vector<32x512xi32> -> vector<32x512xi32>
    %49 = arith.sitofp %48 : vector<32x512xi32> to vector<32x512xf32>
    %50 = vector.extract_strided_slice %3 {offsets = [5, 0], sizes = [1, 32], strides = [1, 1]} : vector<8x32xf32> to vector<1x32xf32>
    %cst_13 = arith.constant dense<0.000000e+00> : vector<1x512xf32>
    %51 = tpu.matmul %50, %49, %cst_13 {dimension_numbers = #tpu.dot_dimension_numbers<[1], [0], [0], [1], [0, 0, 1, 1], [], []>} : vector<1x32xf32>, vector<32x512xf32>, vector<1x512xf32> -> vector<1x512xf32>
    %c24_i32 = arith.constant 24 : i32
    %52 = vector.broadcast %c24_i32 : i32 to vector<32x512xi32>
    %53 = arith.shrui %5, %52 : vector<32x512xi32>
    %c15_i32_14 = arith.constant 15 : i32
    %54 = vector.broadcast %c15_i32_14 : i32 to vector<32x512xi32>
    %55 = arith.andi %53, %54 : vector<32x512xi32>
    %56 = tpu.bitcast %55 : vector<32x512xi32> -> vector<32x512xi32>
    %57 = arith.sitofp %56 : vector<32x512xi32> to vector<32x512xf32>
    %58 = vector.extract_strided_slice %3 {offsets = [6, 0], sizes = [1, 32], strides = [1, 1]} : vector<8x32xf32> to vector<1x32xf32>
    %cst_15 = arith.constant dense<0.000000e+00> : vector<1x512xf32>
    %59 = tpu.matmul %58, %57, %cst_15 {dimension_numbers = #tpu.dot_dimension_numbers<[1], [0], [0], [1], [0, 0, 1, 1], [], []>} : vector<1x32xf32>, vector<32x512xf32>, vector<1x512xf32> -> vector<1x512xf32>
    %c28_i32 = arith.constant 28 : i32
    %60 = vector.broadcast %c28_i32 : i32 to vector<32x512xi32>
    %61 = arith.shrui %5, %60 : vector<32x512xi32>
    %62 = tpu.bitcast %61 : vector<32x512xi32> -> vector<32x512xi32>
    %63 = arith.sitofp %62 : vector<32x512xi32> to vector<32x512xf32>
    %64 = vector.extract_strided_slice %3 {offsets = [7, 0], sizes = [1, 32], strides = [1, 1]} : vector<8x32xf32> to vector<1x32xf32>
    %cst_16 = arith.constant dense<0.000000e+00> : vector<1x512xf32>
    %65 = tpu.matmul %64, %63, %cst_16 {dimension_numbers = #tpu.dot_dimension_numbers<[1], [0], [0], [1], [0, 0, 1, 1], [], []>} : vector<1x32xf32>, vector<32x512xf32>, vector<1x512xf32> -> vector<1x512xf32>
    %66 = arith.addf %11, %19 : vector<1x512xf32>
    %67 = arith.addf %27, %35 : vector<1x512xf32>
    %68 = arith.addf %43, %51 : vector<1x512xf32>
    %69 = arith.addf %59, %65 : vector<1x512xf32>
    %70 = arith.addf %66, %67 : vector<1x512xf32>
    %71 = arith.addf %68, %69 : vector<1x512xf32>
    %72 = arith.addf %70, %71 : vector<1x512xf32>
    %c0_17 = arith.constant 0 : index
    %c0_18 = arith.constant 0 : index
    %73 = vector.load %arg7[%c0_17, %c0_18] : memref<1x512xf32, #tpu.memory_space<vmem>>, vector<1x512xf32>
    %74 = arith.addf %73, %72 : vector<1x512xf32>
    %c0_19 = arith.constant 0 : index
    %c0_20 = arith.constant 0 : index
    %75 = vector.load %arg7[%c0_19, %c0_20] : memref<1x512xf32, #tpu.memory_space<vmem>>, vector<1x512xf32>
    tpu.vector_store %arg7[%c0_19, %c0_20], %74 {strides = array<i32>} : memref<1x512xf32, #tpu.memory_space<vmem>>, vector<1x512xf32>,
    %c0_i32_21 = arith.constant 0 : i32
    %76 = arith.cmpi eq, %arg1, %c0_i32_21 : i32
    %77 = arith.extui %76 : i1 to i32
    %c0_i32_22 = arith.constant 0 : i32
    %78 = arith.cmpi ne, %77, %c0_i32_22 : i32
    scf.if %78 {
      %c0_23 = arith.constant 0 : index
      %c0_24 = arith.constant 0 : index
      %79 = vector.load %arg4[%c0_23, %c0_24] : memref<1x512xf32, #tpu.memory_space<vmem>>, vector<1x512xf32>
      %c0_25 = arith.constant 0 : index
      %c0_26 = arith.constant 0 : index
      %80 = vector.load %arg7[%c0_25, %c0_26] : memref<1x512xf32, #tpu.memory_space<vmem>>, vector<1x512xf32>
      %81 = arith.mulf %79, %80 : vector<1x512xf32>
      %c0_27 = arith.constant 0 : index
      %c0_28 = arith.constant 0 : index
      %82 = vector.load %arg5[%c0_27, %c0_28] : memref<1x512xf32, #tpu.memory_space<vmem>>, vector<1x512xf32>
      %83 = arith.addf %81, %82 : vector<1x512xf32>
      %c0_29 = arith.constant 0 : index
      %c0_30 = arith.constant 0 : index
      %84 = vector.load %arg6[%c0_29, %c0_30] : memref<1x512xf32, #tpu.memory_space<vmem>>, vector<1x512xf32>
      tpu.vector_store %arg6[%c0_29, %c0_30], %83 {strides = array<i32>} : memref<1x512xf32, #tpu.memory_space<vmem>>, vector<1x512xf32>,
    } else {
    }
    return
  }
  func.func @transform_0(%arg0: i32, %arg1: i32) -> (i32, i32) {
    %c0_i32 = arith.constant 0 : i32
    %c0_i32_0 = arith.constant 0 : i32
    return %c0_i32, %arg1 : i32, i32
  }
  func.func @transform_1(%arg0: i32, %arg1: i32) -> (i32, i32) {
    %c0_i32 = arith.constant 0 : i32
    return %arg1, %arg0 : i32, i32
  }
  func.func @transform_2(%arg0: i32, %arg1: i32) -> (i32, i32) {
    %c0_i32 = arith.constant 0 : i32
    %c0_i32_0 = arith.constant 0 : i32
    return %c0_i32, %arg0 : i32, i32
  }
  func.func @transform_3(%arg0: i32, %arg1: i32) -> (i32, i32) {
    %c0_i32 = arith.constant 0 : i32
    %c0_i32_0 = arith.constant 0 : i32
    return %c0_i32, %arg0 : i32, i32
  }
  func.func @transform_4(%arg0: i32, %arg1: i32) -> (i32, i32) {
    %c0_i32 = arith.constant 0 : i32
    %c0_i32_0 = arith.constant 0 : i32
    return %c0_i32, %arg0 : i32, i32
  }
}

</mosaic_0001>

<llo_original>
// kernel: tpu_custom_call.1
$region0: #{tpu_custom_call.1}
  #allocation0 [shape = 'u32[]', space=smem, size = 0x4, offset = 0x4, fixed_abs, tag = 'smem constant byte address 0x4 - core index']
  #allocation1 [shape = 'u32[72,128]{1,0:T(1,128)}', space=vmem, size = 0x9000, scoped, tag = 'internal scratch']
  #allocation2 [shape = 'f32[1,512]{1,0:T(1,128)}', space=vmem, size = 0x800, scoped, tag = 'scratch operand']
  %s0 = inlined_call_operand.hbm [shape: f32[8,32], index: 0, kind: input, shape index: {}]
  %s1 = inlined_call_operand.hbm [shape: s32[32,512], index: 1, kind: input, shape index: {}]
  %s2 = inlined_call_operand.hbm [shape: f32[1,512], index: 2, kind: input, shape index: {}]
  %s3 = inlined_call_operand.hbm [shape: f32[1,512], index: 3, kind: input, shape index: {}]
  %s4 = inlined_call_operand.hbm [shape: f32[1,512], index: 4, kind: output, shape index: {}]
  %s5 = sld [smem:[#allocation0]]
  $region50: #{tpu_custom_call.1} parent=0
    _
  %s7 = ssub.s32 1, %s5
  %s8 = scalar_select 0, %s7, %s5
  $region1: #{tpu_custom_call.1} parent=0
    #allocation3 [shape = 'u8[4096]{0}', space=vmem, size = 0x1000, scoped, tag = 'input window, operand 0, single buffered']
    #allocation4 [shape = 's32[1]{0}', space=sflag, size = 0x4, scoped, tag = 'scoped memory for tpu_custom_call.1']
    #allocation5 [shape = 's32[1]{0}', space=sflag, size = 0x4, scoped, tag = 'scoped memory for tpu_custom_call.1']
    #allocation6 [shape = 'u8[65536]{0}', space=vmem, size = 0x10000, scoped, tag = 'input window, operand 1, single buffered']
    #allocation7 [shape = 's32[1]{0}', space=sflag, size = 0x4, scoped, tag = 'scoped memory for tpu_custom_call.1']
    #allocation8 [shape = 'u8[2048]{0}', space=vmem, size = 0x800, scoped, tag = 'input window, operand 2, single buffered']
    #allocation9 [shape = 'u8[2048]{0}', space=vmem, size = 0x800, scoped, tag = 'input window, operand 3, single buffered']
    #allocation10 [shape = 's32[1]{0}', space=sflag, size = 0x4, scoped, tag = 'scoped memory for tpu_custom_call.1']
    #allocation11 [shape = 'u8[2048]{0}', space=vmem, size = 0x800, scoped, tag = 'output window, operand 0, single buffered']
    %9 = vsyncpa [#allocation4], 0
    %10 = vsyncpa [#allocation7], 0
    %11 = vsyncpa [#allocation10], 0
    %12 = vsyncpa [#allocation5], 0
    // Predicated region
    $region2: #{tpu_custom_call.1} parent=1 // pred_check
      _
    $region3: #{tpu_custom_call.1} parent=1 // pred_check_branch
      %14 = sbr.rel (0) target = $region5
    $region4: #{tpu_custom_call.1} parent=1 // pred_region
      %16 = vsyncadd [#allocation4], 0
      %s18 = sshll.u32 %s0, 4
      %s19 = int_to_ptr.hbm [resolvable:$true] %s18
      %s20 = sshll.u32 [#allocation3], 4
      %s21 = int_to_ptr.vmem [resolvable:$true] %s20
      %23 = dma.hbm_to_vmem [thread:$0]  %s19, 128, %s21, [#allocation4]
    $region5: #{tpu_custom_call.1} parent=1 // pred_fallthru
      _
    // Predicated region
    $region6: #{tpu_custom_call.1} parent=1 // pred_check
      _
    $region7: #{tpu_custom_call.1} parent=1 // pred_check_branch
      %25 = sbr.rel (0) target = $region9
    $region8: #{tpu_custom_call.1} parent=1 // pred_region
      %27 = vsyncadd [#allocation7], 0
      %s28 = sshll.u32 %s1, 4
      %s29 = int_to_ptr.hbm [resolvable:$true] %s28
      %s30 = sshll.u32 [#allocation6], 4
      %s31 = int_to_ptr.vmem [resolvable:$true] %s30
      %36 = dma.hbm_to_vmem [thread:$0]  %s29, 2048, %s31, [#allocation7], 512, 512, 32
    $region9: #{tpu_custom_call.1} parent=1 // pred_fallthru
      _
    // Predicated region
    $region10: #{tpu_custom_call.1} parent=1 // pred_check
      _
    $region11: #{tpu_custom_call.1} parent=1 // pred_check_branch
      %38 = sbr.rel (0) target = $region13
    $region12: #{tpu_custom_call.1} parent=1 // pred_region
      %40 = vsyncadd [#allocation7], 0
      %s42 = sshll.u32 %s2, 4
      %s43 = int_to_ptr.hbm [resolvable:$true] %s42
      %s44 = sshll.u32 [#allocation8], 4
      %s45 = int_to_ptr.vmem [resolvable:$true] %s44
      %47 = dma.hbm_to_vmem [thread:$0]  %s43, 64, %s45, [#allocation7]
    $region13: #{tpu_custom_call.1} parent=1 // pred_fallthru
      _
    // Predicated region
    $region14: #{tpu_custom_call.1} parent=1 // pred_check
      _
    $region15: #{tpu_custom_call.1} parent=1 // pred_check_branch
      %49 = sbr.rel (0) target = $region17
    $region16: #{tpu_custom_call.1} parent=1 // pred_region
      %51 = vsyncadd [#allocation10], 0
      %s53 = sshll.u32 %s3, 4
      %s54 = int_to_ptr.hbm [resolvable:$true] %s53
      %s55 = sshll.u32 [#allocation9], 4
      %s56 = int_to_ptr.vmem [resolvable:$true] %s55
      %58 = dma.hbm_to_vmem [thread:$0]  %s54, 64, %s56, [#allocation10]
    $region17: #{tpu_custom_call.1} parent=1 // pred_fallthru
      _
    // Predicated region
    $region18: #{tpu_custom_call.1} parent=1 // pred_check
      _
    $region19: #{tpu_custom_call.1} parent=1 // pred_check_branch
      %60 = sbr.rel (0) target = $region21
    $region20: #{tpu_custom_call.1} parent=1 // pred_region
      %62 = dma.done [#allocation4], 128
    $region21: #{tpu_custom_call.1} parent=1 // pred_fallthru
      _
    // Predicated region
    $region22: #{tpu_custom_call.1} parent=1 // pred_check
      _
    $region23: #{tpu_custom_call.1} parent=1 // pred_check_branch
      %64 = sbr.rel (0) target = $region25
    $region24: #{tpu_custom_call.1} parent=1 // pred_region
      %66 = dma.done [#allocation7], 2048
    $region25: #{tpu_custom_call.1} parent=1 // pred_fallthru
      _
    // Predicated region
    $region26: #{tpu_custom_call.1} parent=1 // pred_check
      _
    $region27: #{tpu_custom_call.1} parent=1 // pred_check_branch
      %68 = sbr.rel (0) target = $region29
    $region28: #{tpu_custom_call.1} parent=1 // pred_region
      %70 = dma.done [#allocation7], 64
    $region29: #{tpu_custom_call.1} parent=1 // pred_fallthru
      _
    // Predicated region
    $region30: #{tpu_custom_call.1} parent=1 // pred_check
      _
    $region31: #{tpu_custom_call.1} parent=1 // pred_check_branch
      %72 = sbr.rel (0) target = $region33
    $region32: #{tpu_custom_call.1} parent=1 // pred_region
      %74 = dma.done [#allocation10], 64
    $region33: #{tpu_custom_call.1} parent=1 // pred_fallthru
      _
    %p75 = scmp.eq.s32.totalorder 0, 0
    // Predicated region
    $region34: #{tpu_custom_call.1} parent=1 // pred_check
      %p76 = pneg %p75
    $region35: #{tpu_custom_call.1} parent=1 // pred_check_branch
      %78 = sbr.rel (%p76) target = $region37
    $region36: #{tpu_custom_call.1} parent=1 // pred_region
      %v79 = vlaneseq
      %vm80 = vcmp.ge.s32.totalorder %v79, 0
      %vm81 = vcmp.lt.s32.totalorder %v79, 512
      %vm82 = vmand %vm80, %vm81
      %83 = vst.msk [vmem:[#allocation2] sm:$0xf] %vm82, 0.0
    $region37: #{tpu_custom_call.1} parent=1 // pred_fallthru
      _
    %v84 = vld [vmem:[#allocation3] sm:$0xff]
    %v85 = vld [vmem:[#allocation6] sm:$0xff]
    %v86 = vld [vmem:[#allocation6 + $0x8] sm:$0xff]
    %v87 = vld [vmem:[#allocation6 + $0x10] sm:$0xff]
    %v88 = vld [vmem:[#allocation6 + $0x18] sm:$0xff]
    %v89 = vld [vmem:[#allocation6 + $0x20] sm:$0xff]
    %v90 = vld [vmem:[#allocation6 + $0x28] sm:$0xff]
    %v91 = vld [vmem:[#allocation6 + $0x30] sm:$0xff]
    %v92 = vld [vmem:[#allocation6 + $0x38] sm:$0xff]
    %v93 = vld [vmem:[#allocation6 + $0x40] sm:$0xff]
    %v94 = vld [vmem:[#allocation6 + $0x48] sm:$0xff]
    %v95 = vld [vmem:[#allocation6 + $0x50] sm:$0xff]
    %v96 = vld [vmem:[#allocation6 + $0x58] sm:$0xff]
    %v97 = vld [vmem:[#allocation6 + $0x60] sm:$0xff]
    %v98 = vld [vmem:[#allocation6 + $0x68] sm:$0xff]
    %v99 = vld [vmem:[#allocation6 + $0x70] sm:$0xff]
    %v100 = vld [vmem:[#allocation6 + $0x78] sm:$0xff]
    %v101 = vand.u32 %v85, 15
    %v102 = vand.u32 %v86, 15
    %v103 = vand.u32 %v87, 15
    %v104 = vand.u32 %v88, 15
    %v105 = vand.u32 %v89, 15
    %v106 = vand.u32 %v90, 15
    %v107 = vand.u32 %v91, 15
    %v108 = vand.u32 %v92, 15
    %v109 = vand.u32 %v93, 15
    %v110 = vand.u32 %v94, 15
    %v111 = vand.u32 %v95, 15
    %v112 = vand.u32 %v96, 15
    %v113 = vand.u32 %v97, 15
    %v114 = vand.u32 %v98, 15
    %v115 = vand.u32 %v99, 15
    %v116 = vand.u32 %v100, 15
    %v117 = vcvt.s32.f32 %v101
    %v118 = vcvt.s32.f32 %v102
    %v119 = vcvt.s32.f32 %v103
    %v120 = vcvt.s32.f32 %v104
    %v121 = vcvt.s32.f32 %v105
    %v122 = vcvt.s32.f32 %v106
    %v123 = vcvt.s32.f32 %v107
    %v124 = vcvt.s32.f32 %v108
    %v125 = vcvt.s32.f32 %v109
    %v126 = vcvt.s32.f32 %v110
    %v127 = vcvt.s32.f32 %v111
    %v128 = vcvt.s32.f32 %v112
    %v129 = vcvt.s32.f32 %v113
    %v130 = vcvt.s32.f32 %v114
    %v131 = vcvt.s32.f32 %v115
    %v132 = vcvt.s32.f32 %v116
    %v133 = vshrl.u32 %v85, 4
    %v134 = vshrl.u32 %v86, 4
    %v135 = vshrl.u32 %v87, 4
    %v136 = vshrl.u32 %v88, 4
    %v137 = vshrl.u32 %v89, 4
    %v138 = vshrl.u32 %v90, 4
    %v139 = vshrl.u32 %v91, 4
    %v140 = vshrl.u32 %v92, 4
    %v141 = vshrl.u32 %v93, 4
    %v142 = vshrl.u32 %v94, 4
    %v143 = vshrl.u32 %v95, 4
    %v144 = vshrl.u32 %v96, 4
    %v145 = vshrl.u32 %v97, 4
    %v146 = vshrl.u32 %v98, 4
    %v147 = vshrl.u32 %v99, 4
    %v148 = vshrl.u32 %v100, 4
    %v149 = vand.u32 %v133, 15
    %v150 = vand.u32 %v134, 15
    %v151 = vand.u32 %v135, 15
    %v152 = vand.u32 %v136, 15
    %v153 = vand.u32 %v137, 15
    %v154 = vand.u32 %v138, 15
    %v155 = vand.u32 %v139, 15
    %v156 = vand.u32 %v140, 15
    %v157 = vand.u32 %v141, 15
    %v158 = vand.u32 %v142, 15
    %v159 = vand.u32 %v143, 15
    %v160 = vand.u32 %v144, 15
    %v161 = vand.u32 %v145, 15
    %v162 = vand.u32 %v146, 15
    %v163 = vand.u32 %v147, 15
    %v164 = vand.u32 %v148, 15
    %v165 = vcvt.s32.f32 %v149
    %v166 = vcvt.s32.f32 %v150
    %v167 = vcvt.s32.f32 %v151
    %v168 = vcvt.s32.f32 %v152
    %v169 = vcvt.s32.f32 %v153
    %v170 = vcvt.s32.f32 %v154
    %v171 = vcvt.s32.f32 %v155
    %v172 = vcvt.s32.f32 %v156
    %v173 = vcvt.s32.f32 %v157
    %v174 = vcvt.s32.f32 %v158
    %v175 = vcvt.s32.f32 %v159
    %v176 = vcvt.s32.f32 %v160
    %v177 = vcvt.s32.f32 %v161
    %v178 = vcvt.s32.f32 %v162
    %v179 = vcvt.s32.f32 %v163
    %v180 = vcvt.s32.f32 %v164
    %v182 = vrot.slane %v84, 1
    %vm183 = vcmask 261120
    %v184 = vsel %vm183, %v182, 0
    %186 = vmatpush.msra.mxu0 0.0
    %187 = vmatpush.msra.mxu0 0.0
    %188 = vmatpush.msra.mxu0 0.0
    %189 = vmatpush.msra.mxu0 0.0
    %190 = vmatpush.msra.mxu0 0.0
    %191 = vmatpush.msra.mxu0 0.0
    %192 = vmatpush.msra.mxu0 0.0
    %193 = vmatpush.msra.mxu0 0.0
    %194 = vmatpush.msra.mxu0 0.0
    %195 = vmatpush.msra.mxu0 0.0
    %196 = vmatpush.msra.mxu0 0.0
    %197 = vmatpush.msra.mxu0 0.0
    %198 = vmatpush.msra.mxu0 %v177
    %199 = vmatpush.msra.mxu0 %v173
    %200 = vmatpush.msra.mxu0 %v169
    %201 = vmatpush.msra.mxu0 %v165
    %202 = vmatmul.f32.gmra.mxu0 %v184
    %v203 = vpop.f32.mrf.mxu0
    %v204 = vadd.f32 0.0, %v203
    %205 = vdwg.mxu0
    %206 = vmatpush.msra.mxu0 0.0
    %207 = vmatpush.msra.mxu0 0.0
    %208 = vmatpush.msra.mxu0 0.0
    %209 = vmatpush.msra.mxu0 0.0
    %210 = vmatpush.msra.mxu0 0.0
    %211 = vmatpush.msra.mxu0 0.0
    %212 = vmatpush.msra.mxu0 0.0
    %213 = vmatpush.msra.mxu0 0.0
    %214 = vmatpush.msra.mxu0 0.0
    %215 = vmatpush.msra.mxu0 0.0
    %216 = vmatpush.msra.mxu0 0.0
    %217 = vmatpush.msra.mxu0 0.0
    %218 = vmatpush.msra.mxu0 %v178
    %219 = vmatpush.msra.mxu0 %v174
    %220 = vmatpush.msra.mxu0 %v170
    %221 = vmatpush.msra.mxu0 %v166
    %222 = vmatmul.f32.gmra.mxu0 %v184
    %v223 = vpop.f32.mrf.mxu0
    %v224 = vadd.f32 0.0, %v223
    %225 = vdwg.mxu0
    %226 = vmatpush.msra.mxu0 0.0
    %227 = vmatpush.msra.mxu0 0.0
    %228 = vmatpush.msra.mxu0 0.0
    %229 = vmatpush.msra.mxu0 0.0
    %230 = vmatpush.msra.mxu0 0.0
    %231 = vmatpush.msra.mxu0 0.0
    %232 = vmatpush.msra.mxu0 0.0
    %233 = vmatpush.msra.mxu0 0.0
    %234 = vmatpush.msra.mxu0 0.0
    %235 = vmatpush.msra.mxu0 0.0
    %236 = vmatpush.msra.mxu0 0.0
    %237 = vmatpush.msra.mxu0 0.0
    %238 = vmatpush.msra.mxu0 %v179
    %239 = vmatpush.msra.mxu0 %v175
    %240 = vmatpush.msra.mxu0 %v171
    %241 = vmatpush.msra.mxu0 %v167
    %242 = vmatmul.f32.gmra.mxu0 %v184
    %v243 = vpop.f32.mrf.mxu0
    %v244 = vadd.f32 0.0, %v243
    %245 = vdwg.mxu0
    %246 = vmatpush.msra.mxu0 0.0
    %247 = vmatpush.msra.mxu0 0.0
    %248 = vmatpush.msra.mxu0 0.0
    %249 = vmatpush.msra.mxu0 0.0
    %250 = vmatpush.msra.mxu0 0.0
    %251 = vmatpush.msra.mxu0 0.0
    %252 = vmatpush.msra.mxu0 0.0
    %253 = vmatpush.msra.mxu0 0.0
    %254 = vmatpush.msra.mxu0 0.0
    %255 = vmatpush.msra.mxu0 0.0
    %256 = vmatpush.msra.mxu0 0.0
    %257 = vmatpush.msra.mxu0 0.0
    %258 = vmatpush.msra.mxu0 %v180
    %259 = vmatpush.msra.mxu0 %v176
    %260 = vmatpush.msra.mxu0 %v172
    %261 = vmatpush.msra.mxu0 %v168
    %262 = vmatmul.f32.gmra.mxu0 %v184
    %v263 = vpop.f32.mrf.mxu0
    %v264 = vadd.f32 0.0, %v263
    %265 = vdwg.mxu0
    %v266 = vshrl.u32 %v85, 8
    %v267 = vshrl.u32 %v86, 8
    %v268 = vshrl.u32 %v87, 8
    %v269 = vshrl.u32 %v88, 8
    %v270 = vshrl.u32 %v89, 8
    %v271 = vshrl.u32 %v90, 8
    %v272 = vshrl.u32 %v91, 8
    %v273 = vshrl.u32 %v92, 8
    %v274 = vshrl.u32 %v93, 8
    %v275 = vshrl.u32 %v94, 8
    %v276 = vshrl.u32 %v95, 8
    %v277 = vshrl.u32 %v96, 8
    %v278 = vshrl.u32 %v97, 8
    %v279 = vshrl.u32 %v98, 8
    %v280 = vshrl.u32 %v99, 8
    %v281 = vshrl.u32 %v100, 8
    %v282 = vand.u32 %v266, 15
    %v283 = vand.u32 %v267, 15
    %v284 = vand.u32 %v268, 15
    %v285 = vand.u32 %v269, 15
    %v286 = vand.u32 %v270, 15
    %v287 = vand.u32 %v271, 15
    %v288 = vand.u32 %v272, 15
    %v289 = vand.u32 %v273, 15
    %v290 = vand.u32 %v274, 15
    %v291 = vand.u32 %v275, 15
    %v292 = vand.u32 %v276, 15
    %v293 = vand.u32 %v277, 15
    %v294 = vand.u32 %v278, 15
    %v295 = vand.u32 %v279, 15
    %v296 = vand.u32 %v280, 15
    %v297 = vand.u32 %v281, 15
    %v298 = vcvt.s32.f32 %v282
    %v299 = vcvt.s32.f32 %v283
    %v300 = vcvt.s32.f32 %v284
    %v301 = vcvt.s32.f32 %v285
    %v302 = vcvt.s32.f32 %v286
    %v303 = vcvt.s32.f32 %v287
    %v304 = vcvt.s32.f32 %v288
    %v305 = vcvt.s32.f32 %v289
    %v306 = vcvt.s32.f32 %v290
    %v307 = vcvt.s32.f32 %v291
    %v308 = vcvt.s32.f32 %v292
    %v309 = vcvt.s32.f32 %v293
    %v310 = vcvt.s32.f32 %v294
    %v311 = vcvt.s32.f32 %v295
    %v312 = vcvt.s32.f32 %v296
    %v313 = vcvt.s32.f32 %v297
    %v314 = vshrl.u32 %v85, 12
    %v315 = vshrl.u32 %v86, 12
    %v316 = vshrl.u32 %v87, 12
    %v317 = vshrl.u32 %v88, 12
    %v318 = vshrl.u32 %v89, 12
    %v319 = vshrl.u32 %v90, 12
    %v320 = vshrl.u32 %v91, 12
    %v321 = vshrl.u32 %v92, 12
    %v322 = vshrl.u32 %v93, 12
    %v323 = vshrl.u32 %v94, 12
    %v324 = vshrl.u32 %v95, 12
    %v325 = vshrl.u32 %v96, 12
    %v326 = vshrl.u32 %v97, 12
    %v327 = vshrl.u32 %v98, 12
    %v328 = vshrl.u32 %v99, 12
    %v329 = vshrl.u32 %v100, 12
    %v330 = vand.u32 %v314, 15
    %v331 = vand.u32 %v315, 15
    %v332 = vand.u32 %v316, 15
    %v333 = vand.u32 %v317, 15
    %v334 = vand.u32 %v318, 15
    %v335 = vand.u32 %v319, 15
    %v336 = vand.u32 %v320, 15
    %v337 = vand.u32 %v321, 15
    %v338 = vand.u32 %v322, 15
    %v339 = vand.u32 %v323, 15
    %v340 = vand.u32 %v324, 15
    %v341 = vand.u32 %v325, 15
    %v342 = vand.u32 %v326, 15
    %v343 = vand.u32 %v327, 15
    %v344 = vand.u32 %v328, 15
    %v345 = vand.u32 %v329, 15
    %v346 = vcvt.s32.f32 %v330
    %v347 = vcvt.s32.f32 %v331
    %v348 = vcvt.s32.f32 %v332
    %v349 = vcvt.s32.f32 %v333
    %v350 = vcvt.s32.f32 %v334
    %v351 = vcvt.s32.f32 %v335
    %v352 = vcvt.s32.f32 %v336
    %v353 = vcvt.s32.f32 %v337
    %v354 = vcvt.s32.f32 %v338
    %v355 = vcvt.s32.f32 %v339
    %v356 = vcvt.s32.f32 %v340
    %v357 = vcvt.s32.f32 %v341
    %v358 = vcvt.s32.f32 %v342
    %v359 = vcvt.s32.f32 %v343
    %v360 = vcvt.s32.f32 %v344
    %v361 = vcvt.s32.f32 %v345
    %v362 = vrot.slane %v84, 3
    %v363 = vsel %vm183, %v362, 0
    %365 = vmatpush.msra.mxu0 0.0
    %366 = vmatpush.msra.mxu0 0.0
    %367 = vmatpush.msra.mxu0 0.0
    %368 = vmatpush.msra.mxu0 0.0
    %369 = vmatpush.msra.mxu0 0.0
    %370 = vmatpush.msra.mxu0 0.0
    %371 = vmatpush.msra.mxu0 0.0
    %372 = vmatpush.msra.mxu0 0.0
    %373 = vmatpush.msra.mxu0 0.0
    %374 = vmatpush.msra.mxu0 0.0
    %375 = vmatpush.msra.mxu0 0.0
    %376 = vmatpush.msra.mxu0 0.0
    %377 = vmatpush.msra.mxu0 %v358
    %378 = vmatpush.msra.mxu0 %v354
    %379 = vmatpush.msra.mxu0 %v350
    %380 = vmatpush.msra.mxu0 %v346
    %381 = vmatmul.f32.gmra.mxu0 %v363
    %v382 = vpop.f32.mrf.mxu0
    %v383 = vadd.f32 0.0, %v382
    %384 = vdwg.mxu0
    %385 = vmatpush.msra.mxu0 0.0
    %386 = vmatpush.msra.mxu0 0.0
    %387 = vmatpush.msra.mxu0 0.0
    %388 = vmatpush.msra.mxu0 0.0
    %389 = vmatpush.msra.mxu0 0.0
    %390 = vmatpush.msra.mxu0 0.0
    %391 = vmatpush.msra.mxu0 0.0
    %392 = vmatpush.msra.mxu0 0.0
    %393 = vmatpush.msra.mxu0 0.0
    %394 = vmatpush.msra.mxu0 0.0
    %395 = vmatpush.msra.mxu0 0.0
    %396 = vmatpush.msra.mxu0 0.0
    %397 = vmatpush.msra.mxu0 %v359
    %398 = vmatpush.msra.mxu0 %v355
    %399 = vmatpush.msra.mxu0 %v351
    %400 = vmatpush.msra.mxu0 %v347
    %401 = vmatmul.f32.gmra.mxu0 %v363
    %v402 = vpop.f32.mrf.mxu0
    %v403 = vadd.f32 0.0, %v402
    %404 = vdwg.mxu0
    %405 = vmatpush.msra.mxu0 0.0
    %406 = vmatpush.msra.mxu0 0.0
    %407 = vmatpush.msra.mxu0 0.0
    %408 = vmatpush.msra.mxu0 0.0
    %409 = vmatpush.msra.mxu0 0.0
    %410 = vmatpush.msra.mxu0 0.0
    %411 = vmatpush.msra.mxu0 0.0
    %412 = vmatpush.msra.mxu0 0.0
    %413 = vmatpush.msra.mxu0 0.0
    %414 = vmatpush.msra.mxu0 0.0
    %415 = vmatpush.msra.mxu0 0.0
    %416 = vmatpush.msra.mxu0 0.0
    %417 = vmatpush.msra.mxu0 %v360
    %418 = vmatpush.msra.mxu0 %v356
    %419 = vmatpush.msra.mxu0 %v352
    %420 = vmatpush.msra.mxu0 %v348
    %421 = vmatmul.f32.gmra.mxu0 %v363
    %v422 = vpop.f32.mrf.mxu0
    %v423 = vadd.f32 0.0, %v422
    %424 = vdwg.mxu0
    %425 = vmatpush.msra.mxu0 0.0
    %426 = vmatpush.msra.mxu0 0.0
    %427 = vmatpush.msra.mxu0 0.0
    %428 = vmatpush.msra.mxu0 0.0
    %429 = vmatpush.msra.mxu0 0.0
    %430 = vmatpush.msra.mxu0 0.0
    %431 = vmatpush.msra.mxu0 0.0
    %432 = vmatpush.msra.mxu0 0.0
    %433 = vmatpush.msra.mxu0 0.0
    %434 = vmatpush.msra.mxu0 0.0
    %435 = vmatpush.msra.mxu0 0.0
    %436 = vmatpush.msra.mxu0 0.0
    %437 = vmatpush.msra.mxu0 %v361
    %438 = vmatpush.msra.mxu0 %v357
    %439 = vmatpush.msra.mxu0 %v353
    %440 = vmatpush.msra.mxu0 %v349
    %441 = vmatmul.f32.gmra.mxu0 %v363
    %v442 = vpop.f32.mrf.mxu0
    %v443 = vadd.f32 0.0, %v442
    %444 = vdwg.mxu0
    %v445 = vshrl.u32 %v85, 16
    %v446 = vshrl.u32 %v86, 16
    %v447 = vshrl.u32 %v87, 16
    %v448 = vshrl.u32 %v88, 16
    %v449 = vshrl.u32 %v89, 16
    %v450 = vshrl.u32 %v90, 16
    %v451 = vshrl.u32 %v91, 16
    %v452 = vshrl.u32 %v92, 16
    %v453 = vshrl.u32 %v93, 16
    %v454 = vshrl.u32 %v94, 16
    %v455 = vshrl.u32 %v95, 16
    %v456 = vshrl.u32 %v96, 16
    %v457 = vshrl.u32 %v97, 16
    %v458 = vshrl.u32 %v98, 16
    %v459 = vshrl.u32 %v99, 16
    %v460 = vshrl.u32 %v100, 16
    %v461 = vand.u32 %v445, 15
    %v462 = vand.u32 %v446, 15
    %v463 = vand.u32 %v447, 15
    %v464 = vand.u32 %v448, 15
    %v465 = vand.u32 %v449, 15
    %v466 = vand.u32 %v450, 15
    %v467 = vand.u32 %v451, 15
    %v468 = vand.u32 %v452, 15
    %v469 = vand.u32 %v453, 15
    %v470 = vand.u32 %v454, 15
    %v471 = vand.u32 %v455, 15
    %v472 = vand.u32 %v456, 15
    %v473 = vand.u32 %v457, 15
    %v474 = vand.u32 %v458, 15
    %v475 = vand.u32 %v459, 15
    %v476 = vand.u32 %v460, 15
    %v477 = vcvt.s32.f32 %v461
    %v478 = vcvt.s32.f32 %v462
    %v479 = vcvt.s32.f32 %v463
    %v480 = vcvt.s32.f32 %v464
    %v481 = vcvt.s32.f32 %v465
    %v482 = vcvt.s32.f32 %v466
    %v483 = vcvt.s32.f32 %v467
    %v484 = vcvt.s32.f32 %v468
    %v485 = vcvt.s32.f32 %v469
    %v486 = vcvt.s32.f32 %v470
    %v487 = vcvt.s32.f32 %v471
    %v488 = vcvt.s32.f32 %v472
    %v489 = vcvt.s32.f32 %v473
    %v490 = vcvt.s32.f32 %v474
    %v491 = vcvt.s32.f32 %v475
    %v492 = vcvt.s32.f32 %v476
    %v493 = vshrl.u32 %v85, 20
    %v494 = vshrl.u32 %v86, 20
    %v495 = vshrl.u32 %v87, 20
    %v496 = vshrl.u32 %v88, 20
    %v497 = vshrl.u32 %v89, 20
    %v498 = vshrl.u32 %v90, 20
    %v499 = vshrl.u32 %v91, 20
    %v500 = vshrl.u32 %v92, 20
    %v501 = vshrl.u32 %v93, 20
    %v502 = vshrl.u32 %v94, 20
    %v503 = vshrl.u32 %v95, 20
    %v504 = vshrl.u32 %v96, 20
    %v505 = vshrl.u32 %v97, 20
    %v506 = vshrl.u32 %v98, 20
    %v507 = vshrl.u32 %v99, 20
    %v508 = vshrl.u32 %v100, 20
    %v509 = vand.u32 %v493, 15
    %v510 = vand.u32 %v494, 15
    %v511 = vand.u32 %v495, 15
    %v512 = vand.u32 %v496, 15
    %v513 = vand.u32 %v497, 15
    %v514 = vand.u32 %v498, 15
    %v515 = vand.u32 %v499, 15
    %v516 = vand.u32 %v500, 15
    %v517 = vand.u32 %v501, 15
    %v518 = vand.u32 %v502, 15
    %v519 = vand.u32 %v503, 15
    %v520 = vand.u32 %v504, 15
    %v521 = vand.u32 %v505, 15
    %v522 = vand.u32 %v506, 15
    %v523 = vand.u32 %v507, 15
    %v524 = vand.u32 %v508, 15
    %v525 = vcvt.s32.f32 %v509
    %v526 = vcvt.s32.f32 %v510
    %v527 = vcvt.s32.f32 %v511
    %v528 = vcvt.s32.f32 %v512
    %v529 = vcvt.s32.f32 %v513
    %v530 = vcvt.s32.f32 %v514
    %v531 = vcvt.s32.f32 %v515
    %v532 = vcvt.s32.f32 %v516
    %v533 = vcvt.s32.f32 %v517
    %v534 = vcvt.s32.f32 %v518
    %v535 = vcvt.s32.f32 %v519
    %v536 = vcvt.s32.f32 %v520
    %v537 = vcvt.s32.f32 %v521
    %v538 = vcvt.s32.f32 %v522
    %v539 = vcvt.s32.f32 %v523
    %v540 = vcvt.s32.f32 %v524
    %v541 = vrot.slane %v84, 5
    %v542 = vsel %vm183, %v541, 0
    %544 = vmatpush.msra.mxu0 0.0
    %545 = vmatpush.msra.mxu0 0.0
    %546 = vmatpush.msra.mxu0 0.0
    %547 = vmatpush.msra.mxu0 0.0
    %548 = vmatpush.msra.mxu0 0.0
    %549 = vmatpush.msra.mxu0 0.0
    %550 = vmatpush.msra.mxu0 0.0
    %551 = vmatpush.msra.mxu0 0.0
    %552 = vmatpush.msra.mxu0 0.0
    %553 = vmatpush.msra.mxu0 0.0
    %554 = vmatpush.msra.mxu0 0.0
    %555 = vmatpush.msra.mxu0 0.0
    %556 = vmatpush.msra.mxu0 %v537
    %557 = vmatpush.msra.mxu0 %v533
    %558 = vmatpush.msra.mxu0 %v529
    %559 = vmatpush.msra.mxu0 %v525
    %560 = vmatmul.f32.gmra.mxu0 %v542
    %v561 = vpop.f32.mrf.mxu0
    %v562 = vadd.f32 0.0, %v561
    %563 = vdwg.mxu0
    %564 = vmatpush.msra.mxu0 0.0
    %565 = vmatpush.msra.mxu0 0.0
    %566 = vmatpush.msra.mxu0 0.0
    %567 = vmatpush.msra.mxu0 0.0
    %568 = vmatpush.msra.mxu0 0.0
    %569 = vmatpush.msra.mxu0 0.0
    %570 = vmatpush.msra.mxu0 0.0
    %571 = vmatpush.msra.mxu0 0.0
    %572 = vmatpush.msra.mxu0 0.0
    %573 = vmatpush.msra.mxu0 0.0
    %574 = vmatpush.msra.mxu0 0.0
    %575 = vmatpush.msra.mxu0 0.0
    %576 = vmatpush.msra.mxu0 %v538
    %577 = vmatpush.msra.mxu0 %v534
    %578 = vmatpush.msra.mxu0 %v530
    %579 = vmatpush.msra.mxu0 %v526
    %580 = vmatmul.f32.gmra.mxu0 %v542
    %v581 = vpop.f32.mrf.mxu0
    %v582 = vadd.f32 0.0, %v581
    %583 = vdwg.mxu0
    %584 = vmatpush.msra.mxu0 0.0
    %585 = vmatpush.msra.mxu0 0.0
    %586 = vmatpush.msra.mxu0 0.0
    %587 = vmatpush.msra.mxu0 0.0
    %588 = vmatpush.msra.mxu0 0.0
    %589 = vmatpush.msra.mxu0 0.0
    %590 = vmatpush.msra.mxu0 0.0
    %591 = vmatpush.msra.mxu0 0.0
    %592 = vmatpush.msra.mxu0 0.0
    %593 = vmatpush.msra.mxu0 0.0
    %594 = vmatpush.msra.mxu0 0.0
    %595 = vmatpush.msra.mxu0 0.0
    %596 = vmatpush.msra.mxu0 %v539
    %597 = vmatpush.msra.mxu0 %v535
    %598 = vmatpush.msra.mxu0 %v531
    %599 = vmatpush.msra.mxu0 %v527
    %600 = vmatmul.f32.gmra.mxu0 %v542
    %v601 = vpop.f32.mrf.mxu0
    %v602 = vadd.f32 0.0, %v601
    %603 = vdwg.mxu0
    %604 = vmatpush.msra.mxu0 0.0
    %605 = vmatpush.msra.mxu0 0.0
    %606 = vmatpush.msra.mxu0 0.0
    %607 = vmatpush.msra.mxu0 0.0
    %608 = vmatpush.msra.mxu0 0.0
    %609 = vmatpush.msra.mxu0 0.0
    %610 = vmatpush.msra.mxu0 0.0
    %611 = vmatpush.msra.mxu0 0.0
    %612 = vmatpush.msra.mxu0 0.0
    %613 = vmatpush.msra.mxu0 0.0
    %614 = vmatpush.msra.mxu0 0.0
    %615 = vmatpush.msra.mxu0 0.0
    %616 = vmatpush.msra.mxu0 %v540
    %617 = vmatpush.msra.mxu0 %v536
    %618 = vmatpush.msra.mxu0 %v532
    %619 = vmatpush.msra.mxu0 %v528
    %620 = vmatmul.f32.gmra.mxu0 %v542
    %v621 = vpop.f32.mrf.mxu0
    %v622 = vadd.f32 0.0, %v621
    %623 = vdwg.mxu0
    %v624 = vshrl.u32 %v85, 24
    %v625 = vshrl.u32 %v86, 24
    %v626 = vshrl.u32 %v87, 24
    %v627 = vshrl.u32 %v88, 24
    %v628 = vshrl.u32 %v89, 24
    %v629 = vshrl.u32 %v90, 24
    %v630 = vshrl.u32 %v91, 24
    %v631 = vshrl.u32 %v92, 24
    %v632 = vshrl.u32 %v93, 24
    %v633 = vshrl.u32 %v94, 24
    %v634 = vshrl.u32 %v95, 24
    %v635 = vshrl.u32 %v96, 24
    %v636 = vshrl.u32 %v97, 24
    %v637 = vshrl.u32 %v98, 24
    %v638 = vshrl.u32 %v99, 24
    %v639 = vshrl.u32 %v100, 24
    %v640 = vand.u32 %v624, 15
    %v641 = vand.u32 %v625, 15
    %v642 = vand.u32 %v626, 15
    %v643 = vand.u32 %v627, 15
    %v644 = vand.u32 %v628, 15
    %v645 = vand.u32 %v629, 15
    %v646 = vand.u32 %v630, 15
    %v647 = vand.u32 %v631, 15
    %v648 = vand.u32 %v632, 15
    %v649 = vand.u32 %v633, 15
    %v650 = vand.u32 %v634, 15
    %v651 = vand.u32 %v635, 15
    %v652 = vand.u32 %v636, 15
    %v653 = vand.u32 %v637, 15
    %v654 = vand.u32 %v638, 15
    %v655 = vand.u32 %v639, 15
    %v656 = vcvt.s32.f32 %v640
    %v657 = vcvt.s32.f32 %v641
    %v658 = vcvt.s32.f32 %v642
    %v659 = vcvt.s32.f32 %v643
    %v660 = vcvt.s32.f32 %v644
    %v661 = vcvt.s32.f32 %v645
    %v662 = vcvt.s32.f32 %v646
    %v663 = vcvt.s32.f32 %v647
    %v664 = vcvt.s32.f32 %v648
    %v665 = vcvt.s32.f32 %v649
    %v666 = vcvt.s32.f32 %v650
    %v667 = vcvt.s32.f32 %v651
    %v668 = vcvt.s32.f32 %v652
    %v669 = vcvt.s32.f32 %v653
    %v670 = vcvt.s32.f32 %v654
    %v671 = vcvt.s32.f32 %v655
    %v672 = vshrl.u32 %v85, 28
    %v673 = vshrl.u32 %v86, 28
    %v674 = vshrl.u32 %v87, 28
    %v675 = vshrl.u32 %v88, 28
    %v676 = vshrl.u32 %v89, 28
    %v677 = vshrl.u32 %v90, 28
    %v678 = vshrl.u32 %v91, 28
    %v679 = vshrl.u32 %v92, 28
    %v680 = vshrl.u32 %v93, 28
    %v681 = vshrl.u32 %v94, 28
    %v682 = vshrl.u32 %v95, 28
    %v683 = vshrl.u32 %v96, 28
    %v684 = vshrl.u32 %v97, 28
    %v685 = vshrl.u32 %v98, 28
    %v686 = vshrl.u32 %v99, 28
    %v687 = vshrl.u32 %v100, 28
    %v688 = vcvt.s32.f32 %v672
    %v689 = vcvt.s32.f32 %v673
    %v690 = vcvt.s32.f32 %v674
    %v691 = vcvt.s32.f32 %v675
    %v692 = vcvt.s32.f32 %v676
    %v693 = vcvt.s32.f32 %v677
    %v694 = vcvt.s32.f32 %v678
    %v695 = vcvt.s32.f32 %v679
    %v696 = vcvt.s32.f32 %v680
    %v697 = vcvt.s32.f32 %v681
    %v698 = vcvt.s32.f32 %v682
    %v699 = vcvt.s32.f32 %v683
    %v700 = vcvt.s32.f32 %v684
    %v701 = vcvt.s32.f32 %v685
    %v702 = vcvt.s32.f32 %v686
    %v703 = vcvt.s32.f32 %v687
    %v704 = vrot.slane %v84, 7
    %v705 = vsel %vm183, %v704, 0
    %707 = vmatpush.msra.mxu0 0.0
    %708 = vmatpush.msra.mxu0 0.0
    %709 = vmatpush.msra.mxu0 0.0
    %710 = vmatpush.msra.mxu0 0.0
    %711 = vmatpush.msra.mxu0 0.0
    %712 = vmatpush.msra.mxu0 0.0
    %713 = vmatpush.msra.mxu0 0.0
    %714 = vmatpush.msra.mxu0 0.0
    %715 = vmatpush.msra.mxu0 0.0
    %716 = vmatpush.msra.mxu0 0.0
    %717 = vmatpush.msra.mxu0 0.0
    %718 = vmatpush.msra.mxu0 0.0
    %719 = vmatpush.msra.mxu0 %v700
    %720 = vmatpush.msra.mxu0 %v696
    %721 = vmatpush.msra.mxu0 %v692
    %722 = vmatpush.msra.mxu0 %v688
    %723 = vmatmul.f32.gmra.mxu0 %v705
    %v724 = vpop.f32.mrf.mxu0
    %v725 = vadd.f32 0.0, %v724
    %726 = vdwg.mxu0
    %727 = vmatpush.msra.mxu0 0.0
    %728 = vmatpush.msra.mxu0 0.0
    %729 = vmatpush.msra.mxu0 0.0
    %730 = vmatpush.msra.mxu0 0.0
    %731 = vmatpush.msra.mxu0 0.0
    %732 = vmatpush.msra.mxu0 0.0
    %733 = vmatpush.msra.mxu0 0.0
    %734 = vmatpush.msra.mxu0 0.0
    %735 = vmatpush.msra.mxu0 0.0
    %736 = vmatpush.msra.mxu0 0.0
    %737 = vmatpush.msra.mxu0 0.0
    %738 = vmatpush.msra.mxu0 0.0
    %739 = vmatpush.msra.mxu0 %v701
    %740 = vmatpush.msra.mxu0 %v697
    %741 = vmatpush.msra.mxu0 %v693
    %742 = vmatpush.msra.mxu0 %v689
    %743 = vmatmul.f32.gmra.mxu0 %v705
    %v744 = vpop.f32.mrf.mxu0
    %v745 = vadd.f32 0.0, %v744
    %746 = vdwg.mxu0
    %747 = vmatpush.msra.mxu0 0.0
    %748 = vmatpush.msra.mxu0 0.0
    %749 = vmatpush.msra.mxu0 0.0
    %750 = vmatpush.msra.mxu0 0.0
    %751 = vmatpush.msra.mxu0 0.0
    %752 = vmatpush.msra.mxu0 0.0
    %753 = vmatpush.msra.mxu0 0.0
    %754 = vmatpush.msra.mxu0 0.0
    %755 = vmatpush.msra.mxu0 0.0
    %756 = vmatpush.msra.mxu0 0.0
    %757 = vmatpush.msra.mxu0 0.0
    %758 = vmatpush.msra.mxu0 0.0
    %759 = vmatpush.msra.mxu0 %v702
    %760 = vmatpush.msra.mxu0 %v698
    %761 = vmatpush.msra.mxu0 %v694
    %762 = vmatpush.msra.mxu0 %v690
    %763 = vmatmul.f32.gmra.mxu0 %v705
    %v764 = vpop.f32.mrf.mxu0
    %v765 = vadd.f32 0.0, %v764
    %766 = vdwg.mxu0
    %767 = vmatpush.msra.mxu0 0.0
    %768 = vmatpush.msra.mxu0 0.0
    %769 = vmatpush.msra.mxu0 0.0
    %770 = vmatpush.msra.mxu0 0.0
    %771 = vmatpush.msra.mxu0 0.0
    %772 = vmatpush.msra.mxu0 0.0
    %773 = vmatpush.msra.mxu0 0.0
    %774 = vmatpush.msra.mxu0 0.0
    %775 = vmatpush.msra.mxu0 0.0
    %776 = vmatpush.msra.mxu0 0.0
    %777 = vmatpush.msra.mxu0 0.0
    %778 = vmatpush.msra.mxu0 0.0
    %779 = vmatpush.msra.mxu0 %v703
    %780 = vmatpush.msra.mxu0 %v699
    %781 = vmatpush.msra.mxu0 %v695
    %782 = vmatpush.msra.mxu0 %v691
    %783 = vmatmul.f32.gmra.mxu0 %v705
    %v784 = vpop.f32.mrf.mxu0
    %v785 = vadd.f32 0.0, %v784
    %786 = vdwg.mxu0
    %v787 = vsel %vm183, %v84, 0
    %789 = vmatpush.msra.mxu0 0.0
    %790 = vmatpush.msra.mxu0 0.0
    %791 = vmatpush.msra.mxu0 0.0
    %792 = vmatpush.msra.mxu0 0.0
    %793 = vmatpush.msra.mxu0 0.0
    %794 = vmatpush.msra.mxu0 0.0
    %795 = vmatpush.msra.mxu0 0.0
    %796 = vmatpush.msra.mxu0 0.0
    %797 = vmatpush.msra.mxu0 0.0
    %798 = vmatpush.msra.mxu0 0.0
    %799 = vmatpush.msra.mxu0 0.0
    %800 = vmatpush.msra.mxu0 0.0
    %801 = vmatpush.msra.mxu0 %v129
    %802 = vmatpush.msra.mxu0 %v125
    %803 = vmatpush.msra.mxu0 %v121
    %804 = vmatpush.msra.mxu0 %v117
    %805 = vmatmul.f32.gmra.mxu0 %v787
    %v806 = vpop.f32.mrf.mxu0
    %v807 = vadd.f32 %v204, %v806
    %808 = vdwg.mxu0
    %809 = vmatpush.msra.mxu0 0.0
    %810 = vmatpush.msra.mxu0 0.0
    %811 = vmatpush.msra.mxu0 0.0
    %812 = vmatpush.msra.mxu0 0.0
    %813 = vmatpush.msra.mxu0 0.0
    %814 = vmatpush.msra.mxu0 0.0
    %815 = vmatpush.msra.mxu0 0.0
    %816 = vmatpush.msra.mxu0 0.0
    %817 = vmatpush.msra.mxu0 0.0
    %818 = vmatpush.msra.mxu0 0.0
    %819 = vmatpush.msra.mxu0 0.0
    %820 = vmatpush.msra.mxu0 0.0
    %821 = vmatpush.msra.mxu0 %v130
    %822 = vmatpush.msra.mxu0 %v126
    %823 = vmatpush.msra.mxu0 %v122
    %824 = vmatpush.msra.mxu0 %v118
    %825 = vmatmul.f32.gmra.mxu0 %v787
    %v826 = vpop.f32.mrf.mxu0
    %v827 = vadd.f32 %v224, %v826
    %828 = vdwg.mxu0
    %829 = vmatpush.msra.mxu0 0.0
    %830 = vmatpush.msra.mxu0 0.0
    %831 = vmatpush.msra.mxu0 0.0
    %832 = vmatpush.msra.mxu0 0.0
    %833 = vmatpush.msra.mxu0 0.0
    %834 = vmatpush.msra.mxu0 0.0
    %835 = vmatpush.msra.mxu0 0.0
    %836 = vmatpush.msra.mxu0 0.0
    %837 = vmatpush.msra.mxu0 0.0
    %838 = vmatpush.msra.mxu0 0.0
    %839 = vmatpush.msra.mxu0 0.0
    %840 = vmatpush.msra.mxu0 0.0
    %841 = vmatpush.msra.mxu0 %v131
    %842 = vmatpush.msra.mxu0 %v127
    %843 = vmatpush.msra.mxu0 %v123
    %844 = vmatpush.msra.mxu0 %v119
    %845 = vmatmul.f32.gmra.mxu0 %v787
    %v846 = vpop.f32.mrf.mxu0
    %v847 = vadd.f32 %v244, %v846
    %848 = vdwg.mxu0
    %849 = vmatpush.msra.mxu0 0.0
    %850 = vmatpush.msra.mxu0 0.0
    %851 = vmatpush.msra.mxu0 0.0
    %852 = vmatpush.msra.mxu0 0.0
    %853 = vmatpush.msra.mxu0 0.0
    %854 = vmatpush.msra.mxu0 0.0
    %855 = vmatpush.msra.mxu0 0.0
    %856 = vmatpush.msra.mxu0 0.0
    %857 = vmatpush.msra.mxu0 0.0
    %858 = vmatpush.msra.mxu0 0.0
    %859 = vmatpush.msra.mxu0 0.0
    %860 = vmatpush.msra.mxu0 0.0
    %861 = vmatpush.msra.mxu0 %v132
    %862 = vmatpush.msra.mxu0 %v128
    %863 = vmatpush.msra.mxu0 %v124
    %864 = vmatpush.msra.mxu0 %v120
    %865 = vmatmul.f32.gmra.mxu0 %v787
    %v866 = vpop.f32.mrf.mxu0
    %v867 = vadd.f32 %v264, %v866
    %868 = vdwg.mxu0
    %v869 = vrot.slane %v84, 2
    %v870 = vsel %vm183, %v869, 0
    %872 = vmatpush.msra.mxu0 0.0
    %873 = vmatpush.msra.mxu0 0.0
    %874 = vmatpush.msra.mxu0 0.0
    %875 = vmatpush.msra.mxu0 0.0
    %876 = vmatpush.msra.mxu0 0.0
    %877 = vmatpush.msra.mxu0 0.0
    %878 = vmatpush.msra.mxu0 0.0
    %879 = vmatpush.msra.mxu0 0.0
    %880 = vmatpush.msra.mxu0 0.0
    %881 = vmatpush.msra.mxu0 0.0
    %882 = vmatpush.msra.mxu0 0.0
    %883 = vmatpush.msra.mxu0 0.0
    %884 = vmatpush.msra.mxu0 %v310
    %885 = vmatpush.msra.mxu0 %v306
    %886 = vmatpush.msra.mxu0 %v302
    %887 = vmatpush.msra.mxu0 %v298
    %888 = vmatmul.f32.gmra.mxu0 %v870
    %v889 = vpop.f32.mrf.mxu0
    %v890 = vadd.f32 %v383, %v889
    %891 = vdwg.mxu0
    %892 = vmatpush.msra.mxu0 0.0
    %893 = vmatpush.msra.mxu0 0.0
    %894 = vmatpush.msra.mxu0 0.0
    %895 = vmatpush.msra.mxu0 0.0
    %896 = vmatpush.msra.mxu0 0.0
    %897 = vmatpush.msra.mxu0 0.0
    %898 = vmatpush.msra.mxu0 0.0
    %899 = vmatpush.msra.mxu0 0.0
    %900 = vmatpush.msra.mxu0 0.0
    %901 = vmatpush.msra.mxu0 0.0
    %902 = vmatpush.msra.mxu0 0.0
    %903 = vmatpush.msra.mxu0 0.0
    %904 = vmatpush.msra.mxu0 %v311
    %905 = vmatpush.msra.mxu0 %v307
    %906 = vmatpush.msra.mxu0 %v303
    %907 = vmatpush.msra.mxu0 %v299
    %908 = vmatmul.f32.gmra.mxu0 %v870
    %v909 = vpop.f32.mrf.mxu0
    %v910 = vadd.f32 %v403, %v909
    %911 = vdwg.mxu0
    %912 = vmatpush.msra.mxu0 0.0
    %913 = vmatpush.msra.mxu0 0.0
    %914 = vmatpush.msra.mxu0 0.0
    %915 = vmatpush.msra.mxu0 0.0
    %916 = vmatpush.msra.mxu0 0.0
    %917 = vmatpush.msra.mxu0 0.0
    %918 = vmatpush.msra.mxu0 0.0
    %919 = vmatpush.msra.mxu0 0.0
    %920 = vmatpush.msra.mxu0 0.0
    %921 = vmatpush.msra.mxu0 0.0
    %922 = vmatpush.msra.mxu0 0.0
    %923 = vmatpush.msra.mxu0 0.0
    %924 = vmatpush.msra.mxu0 %v312
    %925 = vmatpush.msra.mxu0 %v308
    %926 = vmatpush.msra.mxu0 %v304
    %927 = vmatpush.msra.mxu0 %v300
    %928 = vmatmul.f32.gmra.mxu0 %v870
    %v929 = vpop.f32.mrf.mxu0
    %v930 = vadd.f32 %v423, %v929
    %931 = vdwg.mxu0
    %932 = vmatpush.msra.mxu0 0.0
    %933 = vmatpush.msra.mxu0 0.0
    %934 = vmatpush.msra.mxu0 0.0
    %935 = vmatpush.msra.mxu0 0.0
    %936 = vmatpush.msra.mxu0 0.0
    %937 = vmatpush.msra.mxu0 0.0
    %938 = vmatpush.msra.mxu0 0.0
    %939 = vmatpush.msra.mxu0 0.0
    %940 = vmatpush.msra.mxu0 0.0
    %941 = vmatpush.msra.mxu0 0.0
    %942 = vmatpush.msra.mxu0 0.0
    %943 = vmatpush.msra.mxu0 0.0
    %944 = vmatpush.msra.mxu0 %v313
    %945 = vmatpush.msra.mxu0 %v309
    %946 = vmatpush.msra.mxu0 %v305
    %947 = vmatpush.msra.mxu0 %v301
    %948 = vmatmul.f32.gmra.mxu0 %v870
    %v949 = vpop.f32.mrf.mxu0
    %v950 = vadd.f32 %v443, %v949
    %951 = vdwg.mxu0
    %v952 = vrot.slane %v84, 4
    %v953 = vsel %vm183, %v952, 0
    %955 = vmatpush.msra.mxu0 0.0
    %956 = vmatpush.msra.mxu0 0.0
    %957 = vmatpush.msra.mxu0 0.0
    %958 = vmatpush.msra.mxu0 0.0
    %959 = vmatpush.msra.mxu0 0.0
    %960 = vmatpush.msra.mxu0 0.0
    %961 = vmatpush.msra.mxu0 0.0
    %962 = vmatpush.msra.mxu0 0.0
    %963 = vmatpush.msra.mxu0 0.0
    %964 = vmatpush.msra.mxu0 0.0
    %965 = vmatpush.msra.mxu0 0.0
    %966 = vmatpush.msra.mxu0 0.0
    %967 = vmatpush.msra.mxu0 %v489
    %968 = vmatpush.msra.mxu0 %v485
    %969 = vmatpush.msra.mxu0 %v481
    %970 = vmatpush.msra.mxu0 %v477
    %971 = vmatmul.f32.gmra.mxu0 %v953
    %v972 = vpop.f32.mrf.mxu0
    %v973 = vadd.f32 %v562, %v972
    %974 = vdwg.mxu0
    %975 = vmatpush.msra.mxu0 0.0
    %976 = vmatpush.msra.mxu0 0.0
    %977 = vmatpush.msra.mxu0 0.0
    %978 = vmatpush.msra.mxu0 0.0
    %979 = vmatpush.msra.mxu0 0.0
    %980 = vmatpush.msra.mxu0 0.0
    %981 = vmatpush.msra.mxu0 0.0
    %982 = vmatpush.msra.mxu0 0.0
    %983 = vmatpush.msra.mxu0 0.0
    %984 = vmatpush.msra.mxu0 0.0
    %985 = vmatpush.msra.mxu0 0.0
    %986 = vmatpush.msra.mxu0 0.0
    %987 = vmatpush.msra.mxu0 %v490
    %988 = vmatpush.msra.mxu0 %v486
    %989 = vmatpush.msra.mxu0 %v482
    %990 = vmatpush.msra.mxu0 %v478
    %991 = vmatmul.f32.gmra.mxu0 %v953
    %v992 = vpop.f32.mrf.mxu0
    %v993 = vadd.f32 %v582, %v992
    %994 = vdwg.mxu0
    %995 = vmatpush.msra.mxu0 0.0
    %996 = vmatpush.msra.mxu0 0.0
    %997 = vmatpush.msra.mxu0 0.0
    %998 = vmatpush.msra.mxu0 0.0
    %999 = vmatpush.msra.mxu0 0.0
    %1000 = vmatpush.msra.mxu0 0.0
    %1001 = vmatpush.msra.mxu0 0.0
    %1002 = vmatpush.msra.mxu0 0.0
    %1003 = vmatpush.msra.mxu0 0.0
    %1004 = vmatpush.msra.mxu0 0.0
    %1005 = vmatpush.msra.mxu0 0.0
    %1006 = vmatpush.msra.mxu0 0.0
    %1007 = vmatpush.msra.mxu0 %v491
    %1008 = vmatpush.msra.mxu0 %v487
    %1009 = vmatpush.msra.mxu0 %v483
    %1010 = vmatpush.msra.mxu0 %v479
    %1011 = vmatmul.f32.gmra.mxu0 %v953
    %v1012 = vpop.f32.mrf.mxu0
    %v1013 = vadd.f32 %v602, %v1012
    %1014 = vdwg.mxu0
    %1015 = vmatpush.msra.mxu0 0.0
    %1016 = vmatpush.msra.mxu0 0.0
    %1017 = vmatpush.msra.mxu0 0.0
    %1018 = vmatpush.msra.mxu0 0.0
    %1019 = vmatpush.msra.mxu0 0.0
    %1020 = vmatpush.msra.mxu0 0.0
    %1021 = vmatpush.msra.mxu0 0.0
    %1022 = vmatpush.msra.mxu0 0.0
    %1023 = vmatpush.msra.mxu0 0.0
    %1024 = vmatpush.msra.mxu0 0.0
    %1025 = vmatpush.msra.mxu0 0.0
    %1026 = vmatpush.msra.mxu0 0.0
    %1027 = vmatpush.msra.mxu0 %v492
    %1028 = vmatpush.msra.mxu0 %v488
    %1029 = vmatpush.msra.mxu0 %v484
    %1030 = vmatpush.msra.mxu0 %v480
    %1031 = vmatmul.f32.gmra.mxu0 %v953
    %v1032 = vpop.f32.mrf.mxu0
    %v1033 = vadd.f32 %v622, %v1032
    %1034 = vdwg.mxu0
    %v1035 = vrot.slane %v84, 6
    %v1036 = vsel %vm183, %v1035, 0
    %1038 = vmatpush.msra.mxu0 0.0
    %1039 = vmatpush.msra.mxu0 0.0
    %1040 = vmatpush.msra.mxu0 0.0
    %1041 = vmatpush.msra.mxu0 0.0
    %1042 = vmatpush.msra.mxu0 0.0
    %1043 = vmatpush.msra.mxu0 0.0
    %1044 = vmatpush.msra.mxu0 0.0
    %1045 = vmatpush.msra.mxu0 0.0
    %1046 = vmatpush.msra.mxu0 0.0
    %1047 = vmatpush.msra.mxu0 0.0
    %1048 = vmatpush.msra.mxu0 0.0
    %1049 = vmatpush.msra.mxu0 0.0
    %1050 = vmatpush.msra.mxu0 %v668
    %1051 = vmatpush.msra.mxu0 %v664
    %1052 = vmatpush.msra.mxu0 %v660
    %1053 = vmatpush.msra.mxu0 %v656
    %1054 = vmatmul.f32.gmra.mxu0 %v1036
    %v1055 = vpop.f32.mrf.mxu0
    %v1056 = vadd.f32 %v725, %v1055
    %1057 = vdwg.mxu0
    %1058 = vmatpush.msra.mxu0 0.0
    %1059 = vmatpush.msra.mxu0 0.0
    %1060 = vmatpush.msra.mxu0 0.0
    %1061 = vmatpush.msra.mxu0 0.0
    %1062 = vmatpush.msra.mxu0 0.0
    %1063 = vmatpush.msra.mxu0 0.0
    %1064 = vmatpush.msra.mxu0 0.0
    %1065 = vmatpush.msra.mxu0 0.0
    %1066 = vmatpush.msra.mxu0 0.0
    %1067 = vmatpush.msra.mxu0 0.0
    %1068 = vmatpush.msra.mxu0 0.0
    %1069 = vmatpush.msra.mxu0 0.0
    %1070 = vmatpush.msra.mxu0 %v669
    %1071 = vmatpush.msra.mxu0 %v665
    %1072 = vmatpush.msra.mxu0 %v661
    %1073 = vmatpush.msra.mxu0 %v657
    %1074 = vmatmul.f32.gmra.mxu0 %v1036
    %v1075 = vpop.f32.mrf.mxu0
    %v1076 = vadd.f32 %v745, %v1075
    %1077 = vdwg.mxu0
    %1078 = vmatpush.msra.mxu0 0.0
    %1079 = vmatpush.msra.mxu0 0.0
    %1080 = vmatpush.msra.mxu0 0.0
    %1081 = vmatpush.msra.mxu0 0.0
    %1082 = vmatpush.msra.mxu0 0.0
    %1083 = vmatpush.msra.mxu0 0.0
    %1084 = vmatpush.msra.mxu0 0.0
    %1085 = vmatpush.msra.mxu0 0.0
    %1086 = vmatpush.msra.mxu0 0.0
    %1087 = vmatpush.msra.mxu0 0.0
    %1088 = vmatpush.msra.mxu0 0.0
    %1089 = vmatpush.msra.mxu0 0.0
    %1090 = vmatpush.msra.mxu0 %v670
    %1091 = vmatpush.msra.mxu0 %v666
    %1092 = vmatpush.msra.mxu0 %v662
    %1093 = vmatpush.msra.mxu0 %v658
    %1094 = vmatmul.f32.gmra.mxu0 %v1036
    %v1095 = vpop.f32.mrf.mxu0
    %v1096 = vadd.f32 %v765, %v1095
    %1097 = vdwg.mxu0
    %1098 = vmatpush.msra.mxu0 0.0
    %1099 = vmatpush.msra.mxu0 0.0
    %1100 = vmatpush.msra.mxu0 0.0
    %1101 = vmatpush.msra.mxu0 0.0
    %1102 = vmatpush.msra.mxu0 0.0
    %1103 = vmatpush.msra.mxu0 0.0
    %1104 = vmatpush.msra.mxu0 0.0
    %1105 = vmatpush.msra.mxu0 0.0
    %1106 = vmatpush.msra.mxu0 0.0
    %1107 = vmatpush.msra.mxu0 0.0
    %1108 = vmatpush.msra.mxu0 0.0
    %1109 = vmatpush.msra.mxu0 0.0
    %1110 = vmatpush.msra.mxu0 %v671
    %1111 = vmatpush.msra.mxu0 %v667
    %1112 = vmatpush.msra.mxu0 %v663
    %1113 = vmatpush.msra.mxu0 %v659
    %1114 = vmatmul.f32.gmra.mxu0 %v1036
    %v1115 = vpop.f32.mrf.mxu0
    %v1116 = vadd.f32 %v785, %v1115
    %1117 = vdwg.mxu0
    %v1118 = vadd.f32 %v807, %v890
    %v1119 = vadd.f32 %v827, %v910
    %v1120 = vadd.f32 %v847, %v930
    %v1121 = vadd.f32 %v867, %v950
    %v1122 = vadd.f32 %v973, %v1056
    %v1123 = vadd.f32 %v993, %v1076
    %v1124 = vadd.f32 %v1013, %v1096
    %v1125 = vadd.f32 %v1033, %v1116
    %v1126 = vadd.f32 %v1118, %v1122
    %v1127 = vadd.f32 %v1119, %v1123
    %v1128 = vadd.f32 %v1120, %v1124
    %v1129 = vadd.f32 %v1121, %v1125
    %v1130 = vld [vmem:[#allocation2] sm:$0xf]
    %v1135 = vrot.slane %v1127, 7
    %v1136 = vrot.slane %v1128, 6
    %v1137 = vrot.slane %v1129, 5
    %vm1138 = vcmask 1040384
    %v1139 = vsel %vm1138, %v1126, %v1135
    %vm1140 = vcmask 1042434
    %v1141 = vsel %vm1140, %v1136, %v1137
    %vm1142 = vcmask 1041408
    %v1143 = vsel %vm1142, %v1139, %v1141
    %v1145 = vadd.f32 %v1130, %v1143
    %v1146 = vlaneseq
    %vm1147 = vcmp.ge.s32.totalorder %v1146, 0
    %vm1148 = vcmp.lt.s32.totalorder %v1146, 512
    %vm1149 = vmand %vm1147, %vm1148
    %1150 = vst.msk [vmem:[#allocation2] sm:$0xf] %vm1149, %v1145
    // Predicated region
    $region38: #{tpu_custom_call.1} parent=1 // pred_check
      %p1151 = pneg %p75
    $region39: #{tpu_custom_call.1} parent=1 // pred_check_branch
      %1153 = sbr.rel (%p1151) target = $region41
    $region40: #{tpu_custom_call.1} parent=1 // pred_region
      %v1154 = vld [vmem:[#allocation8] sm:$0xf]
      %v1155 = vld [vmem:[#allocation2] sm:$0xf]
      %v1156 = vmul.f32 %v1154, %v1155
      %v1157 = vld [vmem:[#allocation9] sm:$0xf]
      %v1158 = vadd.f32 %v1156, %v1157
      %1159 = vst.msk [vmem:[#allocation11] sm:$0xf] %vm1149, %v1158
    $region41: #{tpu_custom_call.1} parent=1 // pred_fallthru
      _
    // Predicated region
    $region42: #{tpu_custom_call.1} parent=1 // pred_check
      _
    $region43: #{tpu_custom_call.1} parent=1 // pred_check_branch
      %1161 = sbr.rel (0) target = $region45
    $region44: #{tpu_custom_call.1} parent=1 // pred_region
      %1163 = vsyncadd [#allocation5], 0
      %s1165 = sshll.u32 [#allocation11], 4
      %s1166 = int_to_ptr.vmem [resolvable:$true] %s1165
      %s1167 = sshll.u32 %s4, 4
      %s1168 = int_to_ptr.hbm [resolvable:$true] %s1167
      %1170 = dma.vmem_to_hbm [thread:$0]  %s1166, 64, %s1168, [#allocation5]
    $region45: #{tpu_custom_call.1} parent=1 // pred_fallthru
      _
    // Predicated region
    $region46: #{tpu_custom_call.1} parent=1 // pred_check
      _
    $region47: #{tpu_custom_call.1} parent=1 // pred_check_branch
      %1172 = sbr.rel (0) target = $region49
    $region48: #{tpu_custom_call.1} parent=1 // pred_region
      %1174 = dma.done [#allocation5], 64
    $region49: #{tpu_custom_call.1} parent=1 // pred_fallthru
      _
    %1175 = vsyncpa [#allocation4], 1
    %1176 = vsyncpa [#allocation7], 1
    %1177 = vsyncpa [#allocation10], 1
    %1178 = vsyncpa [#allocation5], 1

</llo_original>
